<compile_context>
chip_gen: v7x
topology: tpu7x:2x2x1
jax: 0.10.0
libtpu: 0.0.40
codegen_flags: <defaults>
</compile_context>

<pallas_src>
import functools

import jax
import jax.numpy as jnp
from jax.experimental import pallas as pl
from jax.experimental.pallas import tpu as pltpu

LANE = 128
SUBLANE = 8


def _round_up(n: int, m: int) -> int:
    return ((n + m - 1) // m) * m


def _cdiv(a: int, b: int) -> int:
    return -(-a // b)


def _pad_to(a, target_shape):
    pads = [(0, t - s) for s, t in zip(a.shape, target_shape)]
    if all(p == (0, 0) for p in pads):
        return a
    return jnp.pad(a, pads)


def _mlp_kernel(x_ref, w1_ref, b1_ref, w2_ref, b2_ref, w3_ref, b3_ref, o_ref,
                *, use_bf16: bool):
    """Fused MLP tile: relu(relu(x@W1+b1)@W2+b2)@W3+b3, all VMEM-resident."""
    cast = (lambda a: a.astype(jnp.bfloat16)) if use_bf16 else (lambda a: a)

    x = x_ref[...]
    h1 = jnp.dot(cast(x), cast(w1_ref[...]),
                 preferred_element_type=jnp.float32) + b1_ref[...]
    h1 = jnp.maximum(h1, 0.0)
    h2 = jnp.dot(cast(h1), cast(w2_ref[...]),
                 preferred_element_type=jnp.float32) + b2_ref[...]
    h2 = jnp.maximum(h2, 0.0)
    out = jnp.dot(cast(h2), cast(w3_ref[...]),
                  preferred_element_type=jnp.float32) + b3_ref[...]
    o_ref[...] = out.astype(o_ref.dtype)


def prepare_params(w1, b1, w2, b2, w3, b3):
    """Pad weights/biases to lane-dense output-feature dims ONCE (not per call).

    Returns (padded_params_tuple, out_size).  Padding is numerically exact:
    padded columns/rows and bias entries are zero and ReLU(0)=0.
    The x feature dim (K of the first matmul) is intentionally NOT padded.
    """
    in_size, hid = w1.shape
    out_size = w3.shape[1]
    hp = _round_up(hid, LANE)
    op = _round_up(out_size, LANE)
    padded = (
        _pad_to(w1, (in_size, hp)), _pad_to(b1, (1, hp)),
        _pad_to(w2, (hp, hp)),      _pad_to(b2, (1, hp)),
        _pad_to(w3, (hp, op)),      _pad_to(b3, (1, op)),
    )
    return padded, out_size


@functools.partial(
    jax.jit,
    static_argnames=("out_size", "block_b", "use_bf16", "return_padded"))
def ewc_forward(x, w1p, b1p, w2p, b2p, w3p, b3p, *, out_size,
                block_b=512, use_bf16=False, return_padded=False):
    """Pallas-backed forward pass of EWCModel.network.

    Expects pre-padded (lane-dense) weights/biases from prepare_params().
    Tiles the batch dim with a "parallel" grid; for batches larger than
    block_b an even number of grid steps is used so both v7x TensorCores
    stay busy.
    """
    batch, in_size = x.shape
    hp = w1p.shape[1]
    op = w3p.shape[1]

    # ---- batch tiling --------------------------------------------------
    bp0 = _round_up(batch, SUBLANE)
    if bp0 <= block_b:
        steps = 1
        tb = bp0
    else:
        steps = _cdiv(bp0, block_b)
        steps += steps % 2                      # even grid >= 2 (v7x megacore)
        tb = _round_up(_cdiv(bp0, steps), SUBLANE)
    bp = tb * steps

    # Pad batch rows only; keep feature dim at logical width (full-extent
    # last dim is exempt from the 128-lane divisibility rule).
    xp = _pad_to(x, (bp, in_size))

    # ---- cost hint for XLA's scheduler ----------------------------------
    itemsize = x.dtype.itemsize
    flops = 2 * bp * (in_size * hp + hp * hp + hp * op)
    bytes_accessed = (
        bp * in_size * itemsize
        + sum(int(a.size) * a.dtype.itemsize for a in (w1p, b1p, w2p, b2p, w3p, b3p))
        + bp * op * itemsize
    )

    rep = lambda shape: pl.BlockSpec(shape, lambda i: (0,) * len(shape))

    out_padded = pl.pallas_call(
        functools.partial(_mlp_kernel, use_bf16=use_bf16),
        out_shape=jax.ShapeDtypeStruct((bp, op), x.dtype),
        grid=(steps,),
        in_specs=[
            pl.BlockSpec((tb, in_size), lambda i: (i, 0)),  # x: tiled over batch
            rep(w1p.shape),                                 # W1 (replicated, VMEM-resident)
            rep(b1p.shape),                                 # b1
            rep(w2p.shape),                                 # W2
            rep(b2p.shape),                                 # b2
            rep(w3p.shape),                                 # W3
            rep(b3p.shape),                                 # b3
        ],
        out_specs=pl.BlockSpec((tb, op), lambda i: (i, 0)),
        compiler_params=pltpu.CompilerParams(
            dimension_semantics=("parallel",),
        ),
        cost_estimate=pl.CostEstimate(
            flops=flops, transcendentals=0, bytes_accessed=bytes_accessed),
    )(xp, w1p, b1p, w2p, b2p, w3p, b3p)

    if return_padded:
        return out_padded                      # (bp, op) lane-dense slab, no extra copy
    return out_padded[:batch, :out_size]


def init_params(key, input_size, hidden_size, output_size, dtype=jnp.float32):
    """PyTorch-style init: U(-1/sqrt(fan_in), 1/sqrt(fan_in)).

    Weights are returned already transposed to (in, out) for the kernel.
    """
    def linear(k, fan_in, fan_out):
        kw, kb = jax.random.split(k)
        bound = 1.0 / jnp.sqrt(fan_in)
        w = jax.random.uniform(kw, (fan_in, fan_out), dtype, -bound, bound)
        b = jax.random.uniform(kb, (1, fan_out), dtype, -bound, bound)
        return w, b

    k1, k2, k3 = jax.random.split(key, 3)
    w1, b1 = linear(k1, input_size, hidden_size)
    w2, b2 = linear(k2, hidden_size, hidden_size)
    w3, b3 = linear(k3, hidden_size, output_size)
    return w1, b1, w2, b2, w3, b3


def _reference(x, w1, b1, w2, b2, w3, b3):
    h = jnp.maximum(x @ w1 + b1, 0.0)
    h = jnp.maximum(h @ w2 + b2, 0.0)
    return h @ w3 + b3


if __name__ == "__main__":
    # Shapes consistent with the module's forward: x is (batch, input_size).
    input_size, hidden_size, output_size = 32, 64, 16

    key = jax.random.PRNGKey(0)
    kx, kx2, kx3, kp = jax.random.split(key, 4)
    raw_params = init_params(kp, input_size, hidden_size, output_size)
    padded_params, out_size = prepare_params(*raw_params)   # padded ONCE
    padded_params = jax.tree_util.tree_map(jax.block_until_ready, padded_params)

    # 1) Small batch (single grid step).
    batch = 4
    x = jax.random.normal(kx, (batch, input_size), dtype=jnp.float32)
    out = ewc_forward(x, *padded_params, out_size=out_size)
    jax.block_until_ready(out)
    ref = _reference(x, *raw_params)
    assert out.shape == (batch, output_size)
    assert jnp.allclose(out, ref, atol=1e-5, rtol=1e-5)

    # 2) Ragged small batch (exercises pad-to-sublane + slice-back).
    batch_small = 10
    x2 = jax.random.normal(kx2, (batch_small, input_size), dtype=jnp.float32)
    out2 = ewc_forward(x2, *padded_params, out_size=out_size)
    jax.block_until_ready(out2)
    ref2 = _reference(x2, *raw_params)
    assert out2.shape == (batch_small, output_size)
    assert jnp.allclose(out2, ref2, atol=1e-5, rtol=1e-5)

    # 3) Larger ragged batch -> even multi-step "parallel" grid (v7x megacore path).
    batch_big = 1056
    x3 = jax.random.normal(kx3, (batch_big, input_size), dtype=jnp.float32)
    out3 = ewc_forward(x3, *padded_params, out_size=out_size)
    jax.block_until_ready(out3)
    ref3 = _reference(x3, *raw_params)
    assert out3.shape == (batch_big, output_size)
    assert jnp.allclose(out3, ref3, atol=1e-5, rtol=1e-5)

    # 4) Optional bf16-operand MXU path (f32 accumulation); sanity check only,
    #    since bf16 operands change the numerics beyond 1e-5 tolerances.
    out_bf16 = ewc_forward(x3, *padded_params, out_size=out_size, use_bf16=True)
    jax.block_until_ready(out_bf16)
    assert out_bf16.shape == (batch_big, output_size)
    assert bool(jnp.all(jnp.isfinite(out_bf16)))

    # TODO(synk): calculate_fisher_information / ewc_loss are training-time
    # bookkeeping (autograd + python dict state), not part of forward; not kernelized.

    print("KERNEL_OK")
</pallas_src>

<mosaic_0001>
module attributes {stable_mosaic.version = 11 : i64} {
  func.func @_mlp_kernel(%arg0: i32, %arg1: memref<8x32xf32, #tpu.memory_space<vmem>>, %arg2: memref<32x128xf32, #tpu.memory_space<vmem>>, %arg3: memref<1x128xf32, #tpu.memory_space<vmem>>, %arg4: memref<128x128xf32, #tpu.memory_space<vmem>>, %arg5: memref<1x128xf32, #tpu.memory_space<vmem>>, %arg6: memref<128x128xf32, #tpu.memory_space<vmem>>, %arg7: memref<1x128xf32, #tpu.memory_space<vmem>>, %arg8: memref<8x128xf32, #tpu.memory_space<vmem>>) attributes {dimension_semantics = [#tpu.dimension_semantics<parallel>], iteration_bounds = array<i64: 1>, scalar_prefetch = 0 : i64, scratch_operands = 0 : i64, tpu.core_type = #tpu.core_type<tc>, window_params = [{transform_indices = @transform_0, window_bounds = array<i64: 8, 32>}, {pipeline_mode = #tpu.pipeline_mode<synchronous>, transform_indices = @transform_1, window_bounds = array<i64: 32, 128>}, {pipeline_mode = #tpu.pipeline_mode<synchronous>, transform_indices = @transform_2, window_bounds = array<i64: 1, 128>}, {pipeline_mode = #tpu.pipeline_mode<synchronous>, transform_indices = @transform_3, window_bounds = array<i64: 128, 128>}, {pipeline_mode = #tpu.pipeline_mode<synchronous>, transform_indices = @transform_4, window_bounds = array<i64: 1, 128>}, {pipeline_mode = #tpu.pipeline_mode<synchronous>, transform_indices = @transform_5, window_bounds = array<i64: 128, 128>}, {pipeline_mode = #tpu.pipeline_mode<synchronous>, transform_indices = @transform_6, window_bounds = array<i64: 1, 128>}, {transform_indices = @transform_7, window_bounds = array<i64: 8, 128>}]} {
    %c0 = arith.constant 0 : index
    %c0_0 = arith.constant 0 : index
    %0 = vector.load %arg1[%c0, %c0_0] : memref<8x32xf32, #tpu.memory_space<vmem>>, vector<8x32xf32>
    %c0_1 = arith.constant 0 : index
    %c0_2 = arith.constant 0 : index
    %1 = vector.load %arg2[%c0_1, %c0_2] : memref<32x128xf32, #tpu.memory_space<vmem>>, vector<32x128xf32>
    %cst = arith.constant dense<0.000000e+00> : vector<8x128xf32>
    %2 = tpu.matmul %0, %1, %cst {dimension_numbers = #tpu.dot_dimension_numbers<[1], [0], [0], [1], [0, 0, 1, 1], [], []>} : vector<8x32xf32>, vector<32x128xf32>, vector<8x128xf32> -> vector<8x128xf32>
    %c0_3 = arith.constant 0 : index
    %c0_4 = arith.constant 0 : index
    %3 = vector.load %arg3[%c0_3, %c0_4] : memref<1x128xf32, #tpu.memory_space<vmem>>, vector<1x128xf32>
    %4 = vector.broadcast %3 : vector<1x128xf32> to vector<8x128xf32>
    %5 = arith.addf %2, %4 : vector<8x128xf32>
    %cst_5 = arith.constant 0.000000e+00 : f32
    %6 = vector.broadcast %cst_5 : f32 to vector<8x128xf32>
    %7 = arith.maximumf %5, %6 : vector<8x128xf32>
    %c0_6 = arith.constant 0 : index
    %c0_7 = arith.constant 0 : index
    %8 = vector.load %arg4[%c0_6, %c0_7] : memref<128x128xf32, #tpu.memory_space<vmem>>, vector<128x128xf32>
    %cst_8 = arith.constant dense<0.000000e+00> : vector<8x128xf32>
    %9 = tpu.matmul %7, %8, %cst_8 {dimension_numbers = #tpu.dot_dimension_numbers<[1], [0], [0], [1], [0, 0, 1, 1], [], []>} : vector<8x128xf32>, vector<128x128xf32>, vector<8x128xf32> -> vector<8x128xf32>
    %c0_9 = arith.constant 0 : index
    %c0_10 = arith.constant 0 : index
    %10 = vector.load %arg5[%c0_9, %c0_10] : memref<1x128xf32, #tpu.memory_space<vmem>>, vector<1x128xf32>
    %11 = vector.broadcast %10 : vector<1x128xf32> to vector<8x128xf32>
    %12 = arith.addf %9, %11 : vector<8x128xf32>
    %cst_11 = arith.constant 0.000000e+00 : f32
    %13 = vector.broadcast %cst_11 : f32 to vector<8x128xf32>
    %14 = arith.maximumf %12, %13 : vector<8x128xf32>
    %c0_12 = arith.constant 0 : index
    %c0_13 = arith.constant 0 : index
    %15 = vector.load %arg6[%c0_12, %c0_13] : memref<128x128xf32, #tpu.memory_space<vmem>>, vector<128x128xf32>
    %cst_14 = arith.constant dense<0.000000e+00> : vector<8x128xf32>
    %16 = tpu.matmul %14, %15, %cst_14 {dimension_numbers = #tpu.dot_dimension_numbers<[1], [0], [0], [1], [0, 0, 1, 1], [], []>} : vector<8x128xf32>, vector<128x128xf32>, vector<8x128xf32> -> vector<8x128xf32>
    %c0_15 = arith.constant 0 : index
    %c0_16 = arith.constant 0 : index
    %17 = vector.load %arg7[%c0_15, %c0_16] : memref<1x128xf32, #tpu.memory_space<vmem>>, vector<1x128xf32>
    %18 = vector.broadcast %17 : vector<1x128xf32> to vector<8x128xf32>
    %19 = arith.addf %16, %18 : vector<8x128xf32>
    %c0_17 = arith.constant 0 : index
    %c0_18 = arith.constant 0 : index
    %20 = vector.load %arg8[%c0_17, %c0_18] : memref<8x128xf32, #tpu.memory_space<vmem>>, vector<8x128xf32>
    tpu.vector_store %arg8[%c0_17, %c0_18], %19 {strides = array<i32>} : memref<8x128xf32, #tpu.memory_space<vmem>>, vector<8x128xf32>,
    return
  }
  func.func @transform_0(%arg0: i32) -> (i32, i32) {
    %c0_i32 = arith.constant 0 : i32
    %c0_i32_0 = arith.constant 0 : i32
    return %arg0, %c0_i32 : i32, i32
  }
  func.func @transform_1(%arg0: i32) -> (i32, i32) {
    %c0_i32 = arith.constant 0 : i32
    %c0_i32_0 = arith.constant 0 : i32
    %c0_i32_1 = arith.constant 0 : i32
    return %c0_i32, %c0_i32_0 : i32, i32
  }
  func.func @transform_2(%arg0: i32) -> (i32, i32) {
    %c0_i32 = arith.constant 0 : i32
    %c0_i32_0 = arith.constant 0 : i32
    %c0_i32_1 = arith.constant 0 : i32
    return %c0_i32, %c0_i32_0 : i32, i32
  }
  func.func @transform_3(%arg0: i32) -> (i32, i32) {
    %c0_i32 = arith.constant 0 : i32
    %c0_i32_0 = arith.constant 0 : i32
    %c0_i32_1 = arith.constant 0 : i32
    return %c0_i32, %c0_i32_0 : i32, i32
  }
  func.func @transform_4(%arg0: i32) -> (i32, i32) {
    %c0_i32 = arith.constant 0 : i32
    %c0_i32_0 = arith.constant 0 : i32
    %c0_i32_1 = arith.constant 0 : i32
    return %c0_i32, %c0_i32_0 : i32, i32
  }
  func.func @transform_5(%arg0: i32) -> (i32, i32) {
    %c0_i32 = arith.constant 0 : i32
    %c0_i32_0 = arith.constant 0 : i32
    %c0_i32_1 = arith.constant 0 : i32
    return %c0_i32, %c0_i32_0 : i32, i32
  }
  func.func @transform_6(%arg0: i32) -> (i32, i32) {
    %c0_i32 = arith.constant 0 : i32
    %c0_i32_0 = arith.constant 0 : i32
    %c0_i32_1 = arith.constant 0 : i32
    return %c0_i32, %c0_i32_0 : i32, i32
  }
  func.func @transform_7(%arg0: i32) -> (i32, i32) {
    %c0_i32 = arith.constant 0 : i32
    %c0_i32_0 = arith.constant 0 : i32
    return %arg0, %c0_i32 : i32, i32
  }
}

</mosaic_0001>

<llo_original>
// kernel: ewc_forward.1
$region0: #{ewc_forward.1}
  #allocation0 [shape = 'u32[]', space=smem, size = 0x4, offset = 0x4, fixed_abs, tag = 'smem constant byte address 0x4 - core index']
  #allocation1 [shape = 'u32[144,128]{1,0:T(1,128)}', space=vmem, size = 0x12000, scoped, tag = 'internal scratch']
  %s0 = inlined_call_operand.vmem [shape: f32[8,32], index: 0, kind: input, shape index: {}]
  %s1 = inlined_call_operand.hbm [shape: f32[32,128], index: 1, kind: input, shape index: {}]
  %s2 = inlined_call_operand.vmem [shape: f32[1,128], index: 2, kind: input, shape index: {}]
  %s3 = inlined_call_operand.hbm [shape: f32[128,128], index: 3, kind: input, shape index: {}]
  %s4 = inlined_call_operand.vmem [shape: f32[1,128], index: 4, kind: input, shape index: {}]
  %s5 = inlined_call_operand.hbm [shape: f32[128,128], index: 5, kind: input, shape index: {}]
  %s6 = inlined_call_operand.vmem [shape: f32[1,128], index: 6, kind: input, shape index: {}]
  %s7 = inlined_call_operand.vmem [shape: f32[8,128], index: 7, kind: output, shape index: {}]
  %s8 = sld [smem:[#allocation0]]
  $region50: #{ewc_forward.1} parent=0
    _
  %s10 = ssub.s32 1, %s8
  %s11 = scalar_select 0, %s10, %s8
  $region1: #{ewc_forward.1} parent=0
    #allocation2 [shape = 'u8[16384]{0}', space=vmem, size = 0x4000, scoped, tag = 'input window, operand 1, single buffered']
    #allocation3 [shape = 's32[1]{0}', space=sflag, size = 0x4, scoped, tag = 'scoped memory for ewc_forward.1']
    #allocation4 [shape = 'u8[65536]{0}', space=vmem, size = 0x10000, scoped, tag = 'input window, operand 3, single buffered']
    #allocation5 [shape = 's32[1]{0}', space=sflag, size = 0x4, scoped, tag = 'scoped memory for ewc_forward.1']
    #allocation6 [shape = 'u8[65536]{0}', space=vmem, size = 0x10000, scoped, tag = 'input window, operand 5, single buffered']
    %12 = vsyncpa [#allocation3], 0
    %13 = vsyncpa [#allocation5], 0
    // Predicated region
    $region2: #{ewc_forward.1} parent=1 // pred_check
      _
    $region3: #{ewc_forward.1} parent=1 // pred_check_branch
      %15 = sbr.rel (0) target = $region5
    $region4: #{ewc_forward.1} parent=1 // pred_region
      _
    $region5: #{ewc_forward.1} parent=1 // pred_fallthru
      _
    // Predicated region
    $region6: #{ewc_forward.1} parent=1 // pred_check
      _
    $region7: #{ewc_forward.1} parent=1 // pred_check_branch
      %17 = sbr.rel (0) target = $region9
    $region8: #{ewc_forward.1} parent=1 // pred_region
      %s19 = ssub.s32 512, 512
      %20 = vsyncadd [#allocation3], %s19
      %s21 = sshll.u32 [#allocation2], 4
      %s22 = int_to_ptr.vmem [resolvable:$true] %s21
      %27 = dma.hbm_to_vmem [thread:$0]  %s1, 512, %s22, [#allocation3], 128, 128, 8
    $region9: #{ewc_forward.1} parent=1 // pred_fallthru
      _
    // Predicated region
    $region10: #{ewc_forward.1} parent=1 // pred_check
      _
    $region11: #{ewc_forward.1} parent=1 // pred_check_branch
      %29 = sbr.rel (0) target = $region13
    $region12: #{ewc_forward.1} parent=1 // pred_region
      _
    $region13: #{ewc_forward.1} parent=1 // pred_fallthru
      _
    // Predicated region
    $region14: #{ewc_forward.1} parent=1 // pred_check
      _
    $region15: #{ewc_forward.1} parent=1 // pred_check_branch
      %31 = sbr.rel (0) target = $region17
    $region16: #{ewc_forward.1} parent=1 // pred_region
      %s33 = ssub.s32 2048, 2048
      %34 = vsyncadd [#allocation5], %s33
      %s35 = sshll.u32 [#allocation4], 4
      %s36 = int_to_ptr.vmem [resolvable:$true] %s35
      %41 = dma.hbm_to_vmem [thread:$0]  %s3, 2048, %s36, [#allocation5], 128, 128, 8
    $region17: #{ewc_forward.1} parent=1 // pred_fallthru
      _
    // Predicated region
    $region18: #{ewc_forward.1} parent=1 // pred_check
      _
    $region19: #{ewc_forward.1} parent=1 // pred_check_branch
      %43 = sbr.rel (0) target = $region21
    $region20: #{ewc_forward.1} parent=1 // pred_region
      _
    $region21: #{ewc_forward.1} parent=1 // pred_fallthru
      _
    // Predicated region
    $region22: #{ewc_forward.1} parent=1 // pred_check
      _
    $region23: #{ewc_forward.1} parent=1 // pred_check_branch
      %45 = sbr.rel (0) target = $region25
    $region24: #{ewc_forward.1} parent=1 // pred_region
      %s47 = ssub.s32 2048, 2048
      %48 = vsyncadd [#allocation5], %s47
      %s49 = sshll.u32 [#allocation6], 4
      %s50 = int_to_ptr.vmem [resolvable:$true] %s49
      %55 = dma.hbm_to_vmem [thread:$0]  %s5, 2048, %s50, [#allocation5], 128, 128, 8
    $region25: #{ewc_forward.1} parent=1 // pred_fallthru
      _
    // Predicated region
    $region26: #{ewc_forward.1} parent=1 // pred_check
      _
    $region27: #{ewc_forward.1} parent=1 // pred_check_branch
      %57 = sbr.rel (0) target = $region29
    $region28: #{ewc_forward.1} parent=1 // pred_region
      _
    $region29: #{ewc_forward.1} parent=1 // pred_fallthru
      _
    // Predicated region
    $region30: #{ewc_forward.1} parent=1 // pred_check
      _
    $region31: #{ewc_forward.1} parent=1 // pred_check_branch
      %59 = sbr.rel (0) target = $region33
    $region32: #{ewc_forward.1} parent=1 // pred_region
      %60 = dma.done [#allocation3], 512
    $region33: #{ewc_forward.1} parent=1 // pred_fallthru
      _
    // Predicated region
    $region34: #{ewc_forward.1} parent=1 // pred_check
      _
    $region35: #{ewc_forward.1} parent=1 // pred_check_branch
      %62 = sbr.rel (0) target = $region37
    $region36: #{ewc_forward.1} parent=1 // pred_region
      %63 = dma.done [#allocation5], 2048
    $region37: #{ewc_forward.1} parent=1 // pred_fallthru
      _
    // Predicated region
    $region38: #{ewc_forward.1} parent=1 // pred_check
      _
    $region39: #{ewc_forward.1} parent=1 // pred_check_branch
      %65 = sbr.rel (0) target = $region41
    $region40: #{ewc_forward.1} parent=1 // pred_region
      %66 = dma.done [#allocation5], 2048
    $region41: #{ewc_forward.1} parent=1 // pred_fallthru
      _
    %v67 = vld [vmem:[%s0] sm:$0xff]
    %v68 = vld [vmem:[#allocation2] sm:$0xff]
    %v69 = vld [vmem:[#allocation2 + $0x8] sm:$0xff]
    %v70 = vld [vmem:[#allocation2 + $0x10] sm:$0xff]
    %v71 = vld [vmem:[#allocation2 + $0x18] sm:$0xff]
    %v72 = vld [vmem:[%s2] sm:$0x1]
    %v74 = vlaneseq
    %v75 = vshrl.u32 %v74, 7
    %v76 = vsub.s32 0, %v75
    %v77 = vrot.slane %v72, %v76
    %vm79 = vcmask 261120
    %v81 = vsel %vm79, %v67, 0
    %83 = vmatprep.subr.mxu0 0.0
    %84 = vmatpush1.msra.mxu0 %v68
    %85 = vmatprep.subr.mxu0 0.0
    %86 = vmatpush1.msra.mxu0 %v69
    %87 = vmatprep.subr.mxu0 0.0
    %88 = vmatpush1.msra.mxu0 %v70
    %89 = vmatprep.subr.mxu0 0.0
    %90 = vmatpush1.msra.mxu0 %v71
    %91 = vmatprep.subr.mxu0 0.0
    %92 = vmatpush1.msra.mxu0 0.0
    %93 = vmatprep.subr.mxu0 0.0
    %94 = vmatpush1.msra.mxu0 0.0
    %95 = vmatprep.subr.mxu0 0.0
    %96 = vmatpush1.msra.mxu0 0.0
    %97 = vmatprep.subr.mxu0 0.0
    %98 = vmatpush1.msra.mxu0 0.0
    %99 = vmatprep.subr.mxu0 0.0
    %100 = vmatpush1.msra.mxu0 0.0
    %101 = vmatprep.subr.mxu0 0.0
    %102 = vmatpush1.msra.mxu0 0.0
    %103 = vmatprep.subr.mxu0 0.0
    %104 = vmatpush1.msra.mxu0 0.0
    %105 = vmatprep.subr.mxu0 0.0
    %106 = vmatpush1.msra.mxu0 0.0
    %107 = vmatprep.subr.mxu0 0.0
    %108 = vmatpush1.msra.mxu0 0.0
    %109 = vmatprep.subr.mxu0 0.0
    %110 = vmatpush1.msra.mxu0 0.0
    %111 = vmatprep.subr.mxu0 0.0
    %112 = vmatpush1.msra.mxu0 0.0
    %113 = vmatprep.subr.mxu0 0.0
    %114 = vmatpush1.msra.mxu0 0.0
    %115 = vmatprep.subr.mxu0 0.0
    %116 = vmatpush1.msra.mxu0 0.0
    %117 = vmatprep.subr.mxu0 0.0
    %118 = vmatpush1.msra.mxu0 0.0
    %119 = vmatprep.subr.mxu0 0.0
    %120 = vmatpush1.msra.mxu0 0.0
    %121 = vmatprep.subr.mxu0 0.0
    %122 = vmatpush1.msra.mxu0 0.0
    %123 = vmatprep.subr.mxu0 0.0
    %124 = vmatpush1.msra.mxu0 0.0
    %125 = vmatprep.subr.mxu0 0.0
    %126 = vmatpush1.msra.mxu0 0.0
    %127 = vmatprep.subr.mxu0 0.0
    %128 = vmatpush1.msra.mxu0 0.0
    %129 = vmatprep.subr.mxu0 0.0
    %130 = vmatpush1.msra.mxu0 0.0
    %131 = vmatprep.subr.mxu0 0.0
    %132 = vmatpush1.msra.mxu0 0.0
    %133 = vmatprep.subr.mxu0 0.0
    %134 = vmatpush1.msra.mxu0 0.0
    %135 = vmatprep.subr.mxu0 0.0
    %136 = vmatpush1.msra.mxu0 0.0
    %137 = vmatprep.subr.mxu0 0.0
    %138 = vmatpush1.msra.mxu0 0.0
    %139 = vmatprep.subr.mxu0 0.0
    %140 = vmatpush1.msra.mxu0 0.0
    %141 = vmatprep.subr.mxu0 0.0
    %142 = vmatpush1.msra.mxu0 0.0
    %143 = vmatprep.subr.mxu0 0.0
    %144 = vmatpush1.msra.mxu0 0.0
    %145 = vmatprep.subr.mxu0 0.0
    %146 = vmatpush1.msra.mxu0 0.0
    %147 = vmatprep.mubr.f32.mxu0 0.0
    %148 = vmatmul.mubr.f32.gmra.mrb[0].mxu0 %v81
    %v149 = vpop.f32.mrb[0].mxu0
    %v150 = vadd.f32 %v77, %v149
    %v151 = vpop.f32.mrb[0].mxu0
    %152 = vdwg.mxu0
    %v153 = vmax.f32 %v150, 0.0
    %v154 = vld [vmem:[#allocation4] sm:$0xff]
    %v155 = vld [vmem:[#allocation4 + $0x8] sm:$0xff]
    %v156 = vld [vmem:[#allocation4 + $0x10] sm:$0xff]
    %v157 = vld [vmem:[#allocation4 + $0x18] sm:$0xff]
    %v158 = vld [vmem:[#allocation4 + $0x20] sm:$0xff]
    %v159 = vld [vmem:[#allocation4 + $0x28] sm:$0xff]
    %v160 = vld [vmem:[#allocation4 + $0x30] sm:$0xff]
    %v161 = vld [vmem:[#allocation4 + $0x38] sm:$0xff]
    %v162 = vld [vmem:[#allocation4 + $0x40] sm:$0xff]
    %v163 = vld [vmem:[#allocation4 + $0x48] sm:$0xff]
    %v164 = vld [vmem:[#allocation4 + $0x50] sm:$0xff]
    %v165 = vld [vmem:[#allocation4 + $0x58] sm:$0xff]
    %v166 = vld [vmem:[#allocation4 + $0x60] sm:$0xff]
    %v167 = vld [vmem:[#allocation4 + $0x68] sm:$0xff]
    %v168 = vld [vmem:[#allocation4 + $0x70] sm:$0xff]
    %v169 = vld [vmem:[#allocation4 + $0x78] sm:$0xff]
    %v170 = vld [vmem:[%s4] sm:$0x1]
    %v172 = vlaneseq
    %v173 = vshrl.u32 %v172, 7
    %v174 = vsub.s32 0, %v173
    %v175 = vrot.slane %v170, %v174
    %177 = vmatprep.subr.mxu0 0.0
    %178 = vmatpush1.msra.mxu0 %v154
    %179 = vmatprep.subr.mxu0 0.0
    %180 = vmatpush1.msra.mxu0 %v155
    %181 = vmatprep.subr.mxu0 0.0
    %182 = vmatpush1.msra.mxu0 %v156
    %183 = vmatprep.subr.mxu0 0.0
    %184 = vmatpush1.msra.mxu0 %v157
    %185 = vmatprep.subr.mxu0 0.0
    %186 = vmatpush1.msra.mxu0 %v158
    %187 = vmatprep.subr.mxu0 0.0
    %188 = vmatpush1.msra.mxu0 %v159
    %189 = vmatprep.subr.mxu0 0.0
    %190 = vmatpush1.msra.mxu0 %v160
    %191 = vmatprep.subr.mxu0 0.0
    %192 = vmatpush1.msra.mxu0 %v161
    %193 = vmatprep.subr.mxu0 0.0
    %194 = vmatpush1.msra.mxu0 %v162
    %195 = vmatprep.subr.mxu0 0.0
    %196 = vmatpush1.msra.mxu0 %v163
    %197 = vmatprep.subr.mxu0 0.0
    %198 = vmatpush1.msra.mxu0 %v164
    %199 = vmatprep.subr.mxu0 0.0
    %200 = vmatpush1.msra.mxu0 %v165
    %201 = vmatprep.subr.mxu0 0.0
    %202 = vmatpush1.msra.mxu0 %v166
    %203 = vmatprep.subr.mxu0 0.0
    %204 = vmatpush1.msra.mxu0 %v167
    %205 = vmatprep.subr.mxu0 0.0
    %206 = vmatpush1.msra.mxu0 %v168
    %207 = vmatprep.subr.mxu0 0.0
    %208 = vmatpush1.msra.mxu0 %v169
    %209 = vmatprep.subr.mxu0 0.0
    %210 = vmatpush1.msra.mxu0 0.0
    %211 = vmatprep.subr.mxu0 0.0
    %212 = vmatpush1.msra.mxu0 0.0
    %213 = vmatprep.subr.mxu0 0.0
    %214 = vmatpush1.msra.mxu0 0.0
    %215 = vmatprep.subr.mxu0 0.0
    %216 = vmatpush1.msra.mxu0 0.0
    %217 = vmatprep.subr.mxu0 0.0
    %218 = vmatpush1.msra.mxu0 0.0
    %219 = vmatprep.subr.mxu0 0.0
    %220 = vmatpush1.msra.mxu0 0.0
    %221 = vmatprep.subr.mxu0 0.0
    %222 = vmatpush1.msra.mxu0 0.0
    %223 = vmatprep.subr.mxu0 0.0
    %224 = vmatpush1.msra.mxu0 0.0
    %225 = vmatprep.subr.mxu0 0.0
    %226 = vmatpush1.msra.mxu0 0.0
    %227 = vmatprep.subr.mxu0 0.0
    %228 = vmatpush1.msra.mxu0 0.0
    %229 = vmatprep.subr.mxu0 0.0
    %230 = vmatpush1.msra.mxu0 0.0
    %231 = vmatprep.subr.mxu0 0.0
    %232 = vmatpush1.msra.mxu0 0.0
    %233 = vmatprep.subr.mxu0 0.0
    %234 = vmatpush1.msra.mxu0 0.0
    %235 = vmatprep.subr.mxu0 0.0
    %236 = vmatpush1.msra.mxu0 0.0
    %237 = vmatprep.subr.mxu0 0.0
    %238 = vmatpush1.msra.mxu0 0.0
    %239 = vmatprep.subr.mxu0 0.0
    %240 = vmatpush1.msra.mxu0 0.0
    %241 = vmatprep.mubr.f32.mxu0 0.0
    %242 = vmatmul.mubr.f32.gmra.mrb[0].mxu0 %v153
    %v243 = vpop.f32.mrb[0].mxu0
    %v244 = vadd.f32 %v175, %v243
    %v245 = vpop.f32.mrb[0].mxu0
    %246 = vdwg.mxu0
    %v247 = vmax.f32 %v244, 0.0
    %v248 = vld [vmem:[#allocation6] sm:$0xff]
    %v249 = vld [vmem:[#allocation6 + $0x8] sm:$0xff]
    %v250 = vld [vmem:[#allocation6 + $0x10] sm:$0xff]
    %v251 = vld [vmem:[#allocation6 + $0x18] sm:$0xff]
    %v252 = vld [vmem:[#allocation6 + $0x20] sm:$0xff]
    %v253 = vld [vmem:[#allocation6 + $0x28] sm:$0xff]
    %v254 = vld [vmem:[#allocation6 + $0x30] sm:$0xff]
    %v255 = vld [vmem:[#allocation6 + $0x38] sm:$0xff]
    %v256 = vld [vmem:[#allocation6 + $0x40] sm:$0xff]
    %v257 = vld [vmem:[#allocation6 + $0x48] sm:$0xff]
    %v258 = vld [vmem:[#allocation6 + $0x50] sm:$0xff]
    %v259 = vld [vmem:[#allocation6 + $0x58] sm:$0xff]
    %v260 = vld [vmem:[#allocation6 + $0x60] sm:$0xff]
    %v261 = vld [vmem:[#allocation6 + $0x68] sm:$0xff]
    %v262 = vld [vmem:[#allocation6 + $0x70] sm:$0xff]
    %v263 = vld [vmem:[#allocation6 + $0x78] sm:$0xff]
    %v264 = vld [vmem:[%s6] sm:$0x1]
    %v266 = vlaneseq
    %v267 = vshrl.u32 %v266, 7
    %v268 = vsub.s32 0, %v267
    %v269 = vrot.slane %v264, %v268
    %271 = vmatprep.subr.mxu0 0.0
    %272 = vmatpush1.msra.mxu0 %v248
    %273 = vmatprep.subr.mxu0 0.0
    %274 = vmatpush1.msra.mxu0 %v249
    %275 = vmatprep.subr.mxu0 0.0
    %276 = vmatpush1.msra.mxu0 %v250
    %277 = vmatprep.subr.mxu0 0.0
    %278 = vmatpush1.msra.mxu0 %v251
    %279 = vmatprep.subr.mxu0 0.0
    %280 = vmatpush1.msra.mxu0 %v252
    %281 = vmatprep.subr.mxu0 0.0
    %282 = vmatpush1.msra.mxu0 %v253
    %283 = vmatprep.subr.mxu0 0.0
    %284 = vmatpush1.msra.mxu0 %v254
    %285 = vmatprep.subr.mxu0 0.0
    %286 = vmatpush1.msra.mxu0 %v255
    %287 = vmatprep.subr.mxu0 0.0
    %288 = vmatpush1.msra.mxu0 %v256
    %289 = vmatprep.subr.mxu0 0.0
    %290 = vmatpush1.msra.mxu0 %v257
    %291 = vmatprep.subr.mxu0 0.0
    %292 = vmatpush1.msra.mxu0 %v258
    %293 = vmatprep.subr.mxu0 0.0
    %294 = vmatpush1.msra.mxu0 %v259
    %295 = vmatprep.subr.mxu0 0.0
    %296 = vmatpush1.msra.mxu0 %v260
    %297 = vmatprep.subr.mxu0 0.0
    %298 = vmatpush1.msra.mxu0 %v261
    %299 = vmatprep.subr.mxu0 0.0
    %300 = vmatpush1.msra.mxu0 %v262
    %301 = vmatprep.subr.mxu0 0.0
    %302 = vmatpush1.msra.mxu0 %v263
    %303 = vmatprep.subr.mxu0 0.0
    %304 = vmatpush1.msra.mxu0 0.0
    %305 = vmatprep.subr.mxu0 0.0
    %306 = vmatpush1.msra.mxu0 0.0
    %307 = vmatprep.subr.mxu0 0.0
    %308 = vmatpush1.msra.mxu0 0.0
    %309 = vmatprep.subr.mxu0 0.0
    %310 = vmatpush1.msra.mxu0 0.0
    %311 = vmatprep.subr.mxu0 0.0
    %312 = vmatpush1.msra.mxu0 0.0
    %313 = vmatprep.subr.mxu0 0.0
    %314 = vmatpush1.msra.mxu0 0.0
    %315 = vmatprep.subr.mxu0 0.0
    %316 = vmatpush1.msra.mxu0 0.0
    %317 = vmatprep.subr.mxu0 0.0
    %318 = vmatpush1.msra.mxu0 0.0
    %319 = vmatprep.subr.mxu0 0.0
    %320 = vmatpush1.msra.mxu0 0.0
    %321 = vmatprep.subr.mxu0 0.0
    %322 = vmatpush1.msra.mxu0 0.0
    %323 = vmatprep.subr.mxu0 0.0
    %324 = vmatpush1.msra.mxu0 0.0
    %325 = vmatprep.subr.mxu0 0.0
    %326 = vmatpush1.msra.mxu0 0.0
    %327 = vmatprep.subr.mxu0 0.0
    %328 = vmatpush1.msra.mxu0 0.0
    %329 = vmatprep.subr.mxu0 0.0
    %330 = vmatpush1.msra.mxu0 0.0
    %331 = vmatprep.subr.mxu0 0.0
    %332 = vmatpush1.msra.mxu0 0.0
    %333 = vmatprep.subr.mxu0 0.0
    %334 = vmatpush1.msra.mxu0 0.0
    %335 = vmatprep.mubr.f32.mxu0 0.0
    %336 = vmatmul.mubr.f32.gmra.mrb[0].mxu0 %v247
    %v337 = vpop.f32.mrb[0].mxu0
    %v338 = vadd.f32 %v269, %v337
    %v339 = vpop.f32.mrb[0].mxu0
    %340 = vdwg.mxu0
    %341 = vst [vmem:[%s7] sm:$0xff] %v338
    // Predicated region
    $region42: #{ewc_forward.1} parent=1 // pred_check
      _
    $region43: #{ewc_forward.1} parent=1 // pred_check_branch
      %343 = sbr.rel (0) target = $region45
    $region44: #{ewc_forward.1} parent=1 // pred_region
      _
    $region45: #{ewc_forward.1} parent=1 // pred_fallthru
      _
    // Predicated region
    $region46: #{ewc_forward.1} parent=1 // pred_check
      _
    $region47: #{ewc_forward.1} parent=1 // pred_check_branch
      %345 = sbr.rel (0) target = $region49
    $region48: #{ewc_forward.1} parent=1 // pred_region
      _
    $region49: #{ewc_forward.1} parent=1 // pred_fallthru
      _
    %346 = vsyncpa [#allocation3], 1
    %347 = vsyncpa [#allocation5], 1

</llo_original>
